<compile_context>
chip_gen: v5e
topology: v5e:2x2
jax: 0.10.0
libtpu: 0.0.40
codegen_flags: <defaults>
</compile_context>

<pallas_src>
import math
import jax
import jax.numpy as jnp
from jax import lax
from jax.experimental import pallas as pl
from jax.experimental.pallas import tpu as pltpu


def _round_up(x, m):
    return ((x + m - 1) // m) * m


def conv_module_forward(x_nchw, weight, bias, stride=1, padding=1):
    """ConvModule.forward (defaults): zero-pad conv2d + bias + ReLU, NCHW->NCHW."""
    N, Cin, H, W = x_nchw.shape
    Cout, Cin_w, KH, KW = weight.shape
    assert Cin_w == Cin
    assert stride == 1, "fused Pallas path implements the module default stride=1"

    Hp, Wp = H + 2 * padding, W + 2 * padding
    Ho, Wo = Hp - KH + 1, Wp - KW + 1
    assert Ho > 0 and Wo > 0

    # Row stride of the flattened padded image.  Align to 128 for wide rows so
    # the static tap offsets ky*Wr stay lane-tile aligned; keep compact for
    # small rows where the padding blowup would dominate.
    Wr = _round_up(Wp, 128) if Wp >= 96 else Wp
    max_off = (KH - 1) * Wr + (KW - 1)            # largest tap lane offset
    TL_raw = _round_up(Ho * Wr, 128)              # output lanes per image

    # ---- Cout (sublane) tiling -------------------------------------------
    if Cout > 256 and Cout % 256 == 0:
        TCout = 256
    elif Cout > 128 and Cout % 128 == 0:
        TCout = 128
    else:
        TCout = Cout
    n_ct = Cout // TCout

    # Fold all KH*KW taps into the contraction dim when Cin is small so the
    # MXU sees K = KH*KW*Cin instead of K = Cin.
    Kfold = KH * KW * Cin
    fold_taps = Kfold <= 512

    # ---- VMEM budget & spatial (lane) tile size ---------------------------
    try:
        vmem_cap = int(pltpu.get_tpu_info().vmem_capacity_bytes)
    except Exception:
        vmem_cap = 64 << 20                        # conservative (v7x per-TC)
    budget = int(vmem_cap * 0.85)                  # ~54 MiB v7x, ~109 MiB v5e/v6e

    w_bytes = Cout * Kfold * 2                     # bf16 weights, fully resident
    resident = 2 * w_bytes + 2 * Cout * 4          # weights + bias buffers
    scratch_per_lane = (4 * Kfold) if fold_taps else (4 * TCout)   # f32 scratch
    per_lane = (2 * 2 * Cin        # image window, bf16, double-buffered
                + 2 * 2 * TCout    # output tile, bf16, double-buffered
                + scratch_per_lane  # lhs / acc scratch (f32)
                + 4 * TCout)       # f32 matmul-result temporary
    img_edge = 2 * 2 * Cin * (max_off + 128)       # window overhang over TS
    avail = budget - resident - img_edge - (6 << 20)
    # TODO(synk): row-tiled fallback instead of asserting for pathological sizes.
    assert avail >= per_lane * 128, "ConvModule Pallas plan exceeds the VMEM budget"

    TS = min(TL_raw, 8192, (avail // per_lane) // 128 * 128)  # lane tile (mult of 128)
    TL = _round_up(TL_raw, TS)
    n_st = TL // TS
    TSW = _round_up(TS + max_off, 128)             # input-window lanes per tile
    Lflat = (TL - TS) + TSW                        # flat padded lanes per image

    # v7x has 2 TensorCores: ensure at least 2 parallel grid steps if possible.
    if N * n_st * n_ct < 2 and Cout % 16 == 0:
        TCout = Cout // 2
        n_ct = 2

    # ---- wrapper-side layout glue (input-sized only; no im2col matrix) ----
    xp = jnp.pad(x_nchw, ((0, 0), (0, 0), (padding, padding),
                          (padding, padding + (Wr - Wp))))
    xp = xp.reshape(N, Cin, Hp * Wr).astype(jnp.bfloat16)
    xflat = jnp.pad(xp, ((0, 0), (0, 0), (0, Lflat - Hp * Wr)))
    # Overlapping lane windows per spatial tile -> every in-kernel slice static.
    xt = jnp.stack([xflat[:, :, s * TS:s * TS + TSW] for s in range(n_st)],
                   axis=1)                                    # (N, n_st, Cin, TSW)

    if fold_taps:
        # (Cout,Cin,KH,KW) -> (Cout,KH,KW,Cin) -> (Cout, KH*KW*Cin), bf16
        w_r = jnp.transpose(weight, (0, 2, 3, 1)).reshape(Cout, Kfold)
        w_r = w_r.astype(jnp.bfloat16)
        w_spec = pl.BlockSpec((Cout, Kfold), lambda n, s, c: (0, 0))
    else:
        w_r = jnp.transpose(weight, (2, 3, 0, 1)).astype(jnp.bfloat16)  # (KH,KW,Cout,Cin)
        w_spec = pl.BlockSpec((KH, KW, Cout, Cin), lambda n, s, c: (0, 0, 0, 0))
    b_r = bias.reshape(Cout, 1).astype(jnp.float32)

    # ---- kernels -----------------------------------------------------------
    def kernel_fold(x_ref, w_ref, b_ref, o_ref, lhs_ref):
        # x_ref: (1,1,Cin,TSW) bf16; w_ref: (Cout,Kfold) bf16 resident
        # b_ref: (Cout,1) f32;  o_ref: (1,TCout,TS) bf16;  lhs_ref: (Kfold,TS) f32
        c0 = pl.multiple_of(pl.program_id(2) * TCout, TCout)
        for ky in range(KH):                       # build folded LHS (static slices)
            for kx in range(KW):
                t = ky * KW + kx
                off = ky * Wr + kx
                lhs_ref[t * Cin:(t + 1) * Cin, :] = (
                    x_ref[0, 0, :, off:off + TS].astype(jnp.float32))
        wt = w_ref[pl.ds(c0, TCout), :]                              # (TCout,Kfold)
        acc = jnp.dot(wt, lhs_ref[...].astype(jnp.bfloat16),
                      preferred_element_type=jnp.float32)            # single MXU pass
        acc = acc + b_ref[pl.ds(c0, TCout), :]                       # fused bias
        o_ref[0] = jnp.maximum(acc, 0.0).astype(o_ref.dtype)         # fused ReLU, bf16

    def kernel_taps(x_ref, w_ref, b_ref, o_ref, acc_ref):
        # Large-Cin path: per-tap matmuls with in-place f32 accumulation.
        c0 = pl.multiple_of(pl.program_id(2) * TCout, TCout)
        acc_ref[...] = jnp.zeros_like(acc_ref)
        for ky in range(KH):
            for kx in range(KW):
                off = ky * Wr + kx
                xs = x_ref[0, 0, :, off:off + TS]                    # (Cin, TS) bf16
                wt = w_ref[ky, kx, pl.ds(c0, TCout), :]              # (TCout, Cin) bf16
                acc_ref[...] += jnp.dot(wt, xs, preferred_element_type=jnp.float32)
        acc = acc_ref[...] + b_ref[pl.ds(c0, TCout), :]
        o_ref[0] = jnp.maximum(acc, 0.0).astype(o_ref.dtype)

    if fold_taps:
        kernel = kernel_fold
        scratch = [pltpu.VMEM((Kfold, TS), jnp.float32)]
    else:
        kernel = kernel_taps
        scratch = [pltpu.VMEM((TCout, TS), jnp.float32)]

    # Image window spec: single-buffer it when its block index never changes.
    if N == 1 and n_st == 1:
        img_spec = pl.BlockSpec((1, 1, Cin, TSW), lambda n, s, c: (n, s, 0, 0),
                                pipeline_mode=pl.Buffered(1))
    else:
        img_spec = pl.BlockSpec((1, 1, Cin, TSW), lambda n, s, c: (n, s, 0, 0))

    flops = 2 * N * Cout * Kfold * TL
    bytes_accessed = xt.size * 2 + w_r.size * 2 + b_r.size * 4 + N * Cout * TL * 2
    cost = pl.CostEstimate(flops=int(flops), transcendentals=0,
                           bytes_accessed=int(bytes_accessed))

    vmem_need = (resident + 2 * 2 * Cin * TSW + 2 * 2 * TCout * TS
                 + scratch_per_lane * TS + 4 * TCout * TS)
    vmem_limit = int(min(budget, max(vmem_need + (8 << 20), 32 << 20)))

    out_lin = pl.pallas_call(
        kernel,
        out_shape=jax.ShapeDtypeStruct((N, Cout, TL), jnp.bfloat16),
        grid_spec=pltpu.PrefetchScalarGridSpec(
            num_scalar_prefetch=0,
            grid=(N, n_st, n_ct),                 # Cout tile innermost: image window
            in_specs=[                            # is fetched once per (n, s)
                img_spec,
                w_spec,                           # constant index -> resident weights
                pl.BlockSpec((Cout, 1), lambda n, s, c: (0, 0)),
            ],
            out_specs=pl.BlockSpec((1, TCout, TS), lambda n, s, c: (n, c, s)),
            scratch_shapes=scratch,
        ),
        compiler_params=pltpu.CompilerParams(
            dimension_semantics=("parallel", "parallel", "parallel"),
            vmem_limit_bytes=vmem_limit),
        cost_estimate=cost,
    )(xt, w_r, b_r)

    # (N, Cout, TL) -> (N, Cout, Ho, Wo): drop row-stride junk columns + lane pad.
    out = out_lin[:, :, :Ho * Wr].reshape(N, Cout, Ho, Wr)[:, :, :, :Wo]
    return out.astype(jnp.float32)


if __name__ == "__main__":
    # ConvModule(in_channels=4, out_channels=8, kernel_size=3, padding=1)
    #   -> conv2d(bias=True) + ReLU, order=('conv','norm','act'), no norm.
    N, Cin, H, W = 2, 4, 16, 16
    Cout, KH, KW = 8, 3, 3
    stride, padding = 1, 1

    key = jax.random.PRNGKey(0)
    k_x, k_w, k_b = jax.random.split(key, 3)
    x = jax.random.normal(k_x, (N, Cin, H, W), dtype=jnp.float32)

    # Kaiming-normal init (mode='fan_out', nonlinearity='relu') like init_weights.
    fan_out = Cout * KH * KW
    std = math.sqrt(2.0 / fan_out)
    weight = std * jax.random.normal(k_w, (Cout, Cin, KH, KW), dtype=jnp.float32)
    # init_weights() zeros the bias; use a small non-zero bias to exercise the
    # fused bias+ReLU epilogue.
    bias = 0.1 * jax.random.normal(k_b, (Cout,), dtype=jnp.float32)

    y = conv_module_forward(x, weight, bias, stride=stride, padding=padding)
    y = jax.block_until_ready(y)
    assert y.shape == (N, Cout, H, W)

    # Reference: conv2d + bias + ReLU on the same bf16-rounded operands; the
    # kernel uses bf16 MXU operands, f32 accumulation and a bf16 output store,
    # so round the reference to bf16 as well before comparing.
    xb = x.astype(jnp.bfloat16).astype(jnp.float32)
    wb = weight.astype(jnp.bfloat16).astype(jnp.float32)
    ref = lax.conv_general_dilated(
        xb, wb, window_strides=(stride, stride),
        padding=((padding, padding), (padding, padding)),
        dimension_numbers=("NCHW", "OIHW", "NCHW"),
        precision=lax.Precision.HIGHEST,
    ) + bias.reshape(1, Cout, 1, 1)
    ref = jnp.maximum(ref, 0.0).astype(jnp.bfloat16).astype(jnp.float32)
    max_err = float(jnp.max(jnp.abs(y - ref)))
    assert jnp.allclose(y, ref, rtol=2e-2, atol=2e-2), max_err

    print("KERNEL_OK")
</pallas_src>

<mosaic_0001>
module attributes {stable_mosaic.version = 11 : i64} {
  func.func @kernel_fold(%arg0: i32, %arg1: i32, %arg2: i32, %arg3: memref<1x1x4x512xbf16, #tpu.memory_space<vmem>>, %arg4: memref<8x36xbf16, #tpu.memory_space<vmem>>, %arg5: memref<8x1xf32, #tpu.memory_space<vmem>>, %arg6: memref<1x8x384xbf16, #tpu.memory_space<vmem>>, %arg7: memref<36x384xf32, #tpu.memory_space<vmem>>) attributes {dimension_semantics = [#tpu.dimension_semantics<parallel>, #tpu.dimension_semantics<parallel>, #tpu.dimension_semantics<parallel>], iteration_bounds = array<i64: 2, 1, 1>, scalar_prefetch = 0 : i64, scratch_operands = 1 : i64, tpu.core_type = #tpu.core_type<tc>, window_params = [{transform_indices = @transform_0, window_bounds = array<i64: 1, 1, 4, 512>}, {pipeline_mode = #tpu.pipeline_mode<synchronous>, transform_indices = @transform_1, window_bounds = array<i64: 8, 36>}, {pipeline_mode = #tpu.pipeline_mode<synchronous>, transform_indices = @transform_2, window_bounds = array<i64: 8, 1>}, {transform_indices = @transform_3, window_bounds = array<i64: 1, 8, 384>}]} {
    %c8_i32 = arith.constant 8 : i32
    %0 = arith.muli %arg2, %c8_i32 : i32
    %1 = tpu.assume_multiple %0, 8 : i32
    %c0 = arith.constant 0 : index
    %c0_0 = arith.constant 0 : index
    %c0_1 = arith.constant 0 : index
    %c0_2 = arith.constant 0 : index
    %2 = vector.load %arg3[%c0, %c0_0, %c0_1, %c0_2] : memref<1x1x4x512xbf16, #tpu.memory_space<vmem>>, vector<1x1x4x384xbf16>
    %3 = vector.shape_cast %2 : vector<1x1x4x384xbf16> to vector<4x384xbf16>
    %4 = arith.extf %3 : vector<4x384xbf16> to vector<4x384xf32>
    %c0_3 = arith.constant 0 : index
    %c0_4 = arith.constant 0 : index
    %5 = vector.load %arg7[%c0_3, %c0_4] : memref<36x384xf32, #tpu.memory_space<vmem>>, vector<4x384xf32>
    tpu.vector_store %arg7[%c0_3, %c0_4], %4 {strides = array<i32>} : memref<36x384xf32, #tpu.memory_space<vmem>>, vector<4x384xf32>,
    %c0_5 = arith.constant 0 : index
    %c0_6 = arith.constant 0 : index
    %c0_7 = arith.constant 0 : index
    %c1 = arith.constant 1 : index
    %6 = vector.load %arg3[%c0_5, %c0_6, %c0_7, %c1] : memref<1x1x4x512xbf16, #tpu.memory_space<vmem>>, vector<1x1x4x384xbf16>
    %7 = vector.shape_cast %6 : vector<1x1x4x384xbf16> to vector<4x384xbf16>
    %8 = arith.extf %7 : vector<4x384xbf16> to vector<4x384xf32>
    %c4 = arith.constant 4 : index
    %c0_8 = arith.constant 0 : index
    %9 = vector.load %arg7[%c4, %c0_8] : memref<36x384xf32, #tpu.memory_space<vmem>>, vector<4x384xf32>
    tpu.vector_store %arg7[%c4, %c0_8], %8 {strides = array<i32>} : memref<36x384xf32, #tpu.memory_space<vmem>>, vector<4x384xf32>,
    %c0_9 = arith.constant 0 : index
    %c0_10 = arith.constant 0 : index
    %c0_11 = arith.constant 0 : index
    %c2 = arith.constant 2 : index
    %10 = vector.load %arg3[%c0_9, %c0_10, %c0_11, %c2] : memref<1x1x4x512xbf16, #tpu.memory_space<vmem>>, vector<1x1x4x384xbf16>
    %11 = vector.shape_cast %10 : vector<1x1x4x384xbf16> to vector<4x384xbf16>
    %12 = arith.extf %11 : vector<4x384xbf16> to vector<4x384xf32>
    %c8 = arith.constant 8 : index
    %c0_12 = arith.constant 0 : index
    %13 = vector.load %arg7[%c8, %c0_12] : memref<36x384xf32, #tpu.memory_space<vmem>>, vector<4x384xf32>
    tpu.vector_store %arg7[%c8, %c0_12], %12 {strides = array<i32>} : memref<36x384xf32, #tpu.memory_space<vmem>>, vector<4x384xf32>,
    %c0_13 = arith.constant 0 : index
    %c0_14 = arith.constant 0 : index
    %c0_15 = arith.constant 0 : index
    %c18 = arith.constant 18 : index
    %14 = vector.load %arg3[%c0_13, %c0_14, %c0_15, %c18] : memref<1x1x4x512xbf16, #tpu.memory_space<vmem>>, vector<1x1x4x384xbf16>
    %15 = vector.shape_cast %14 : vector<1x1x4x384xbf16> to vector<4x384xbf16>
    %16 = arith.extf %15 : vector<4x384xbf16> to vector<4x384xf32>
    %c12 = arith.constant 12 : index
    %c0_16 = arith.constant 0 : index
    %17 = vector.load %arg7[%c12, %c0_16] : memref<36x384xf32, #tpu.memory_space<vmem>>, vector<4x384xf32>
    tpu.vector_store %arg7[%c12, %c0_16], %16 {strides = array<i32>} : memref<36x384xf32, #tpu.memory_space<vmem>>, vector<4x384xf32>,
    %c0_17 = arith.constant 0 : index
    %c0_18 = arith.constant 0 : index
    %c0_19 = arith.constant 0 : index
    %c19 = arith.constant 19 : index
    %18 = vector.load %arg3[%c0_17, %c0_18, %c0_19, %c19] : memref<1x1x4x512xbf16, #tpu.memory_space<vmem>>, vector<1x1x4x384xbf16>
    %19 = vector.shape_cast %18 : vector<1x1x4x384xbf16> to vector<4x384xbf16>
    %20 = arith.extf %19 : vector<4x384xbf16> to vector<4x384xf32>
    %c16 = arith.constant 16 : index
    %c0_20 = arith.constant 0 : index
    %21 = vector.load %arg7[%c16, %c0_20] : memref<36x384xf32, #tpu.memory_space<vmem>>, vector<4x384xf32>
    tpu.vector_store %arg7[%c16, %c0_20], %20 {strides = array<i32>} : memref<36x384xf32, #tpu.memory_space<vmem>>, vector<4x384xf32>,
    %c0_21 = arith.constant 0 : index
    %c0_22 = arith.constant 0 : index
    %c0_23 = arith.constant 0 : index
    %c20 = arith.constant 20 : index
    %22 = vector.load %arg3[%c0_21, %c0_22, %c0_23, %c20] : memref<1x1x4x512xbf16, #tpu.memory_space<vmem>>, vector<1x1x4x384xbf16>
    %23 = vector.shape_cast %22 : vector<1x1x4x384xbf16> to vector<4x384xbf16>
    %24 = arith.extf %23 : vector<4x384xbf16> to vector<4x384xf32>
    %c20_24 = arith.constant 20 : index
    %c0_25 = arith.constant 0 : index
    %25 = vector.load %arg7[%c20_24, %c0_25] : memref<36x384xf32, #tpu.memory_space<vmem>>, vector<4x384xf32>
    tpu.vector_store %arg7[%c20_24, %c0_25], %24 {strides = array<i32>} : memref<36x384xf32, #tpu.memory_space<vmem>>, vector<4x384xf32>,
    %c0_26 = arith.constant 0 : index
    %c0_27 = arith.constant 0 : index
    %c0_28 = arith.constant 0 : index
    %c36 = arith.constant 36 : index
    %26 = vector.load %arg3[%c0_26, %c0_27, %c0_28, %c36] : memref<1x1x4x512xbf16, #tpu.memory_space<vmem>>, vector<1x1x4x384xbf16>
    %27 = vector.shape_cast %26 : vector<1x1x4x384xbf16> to vector<4x384xbf16>
    %28 = arith.extf %27 : vector<4x384xbf16> to vector<4x384xf32>
    %c24 = arith.constant 24 : index
    %c0_29 = arith.constant 0 : index
    %29 = vector.load %arg7[%c24, %c0_29] : memref<36x384xf32, #tpu.memory_space<vmem>>, vector<4x384xf32>
    tpu.vector_store %arg7[%c24, %c0_29], %28 {strides = array<i32>} : memref<36x384xf32, #tpu.memory_space<vmem>>, vector<4x384xf32>,
    %c0_30 = arith.constant 0 : index
    %c0_31 = arith.constant 0 : index
    %c0_32 = arith.constant 0 : index
    %c37 = arith.constant 37 : index
    %30 = vector.load %arg3[%c0_30, %c0_31, %c0_32, %c37] : memref<1x1x4x512xbf16, #tpu.memory_space<vmem>>, vector<1x1x4x384xbf16>
    %31 = vector.shape_cast %30 : vector<1x1x4x384xbf16> to vector<4x384xbf16>
    %32 = arith.extf %31 : vector<4x384xbf16> to vector<4x384xf32>
    %c28 = arith.constant 28 : index
    %c0_33 = arith.constant 0 : index
    %33 = vector.load %arg7[%c28, %c0_33] : memref<36x384xf32, #tpu.memory_space<vmem>>, vector<4x384xf32>
    tpu.vector_store %arg7[%c28, %c0_33], %32 {strides = array<i32>} : memref<36x384xf32, #tpu.memory_space<vmem>>, vector<4x384xf32>,
    %c0_34 = arith.constant 0 : index
    %c0_35 = arith.constant 0 : index
    %c0_36 = arith.constant 0 : index
    %c38 = arith.constant 38 : index
    %34 = vector.load %arg3[%c0_34, %c0_35, %c0_36, %c38] : memref<1x1x4x512xbf16, #tpu.memory_space<vmem>>, vector<1x1x4x384xbf16>
    %35 = vector.shape_cast %34 : vector<1x1x4x384xbf16> to vector<4x384xbf16>
    %36 = arith.extf %35 : vector<4x384xbf16> to vector<4x384xf32>
    %c32 = arith.constant 32 : index
    %c0_37 = arith.constant 0 : index
    %37 = vector.load %arg7[%c32, %c0_37] : memref<36x384xf32, #tpu.memory_space<vmem>>, vector<4x384xf32>
    tpu.vector_store %arg7[%c32, %c0_37], %36 {strides = array<i32>} : memref<36x384xf32, #tpu.memory_space<vmem>>, vector<4x384xf32>,
    %38 = arith.index_cast %1 : i32 to index
    %c0_38 = arith.constant 0 : index
    %39 = vector.load %arg4[%38, %c0_38] : memref<8x36xbf16, #tpu.memory_space<vmem>>, vector<8x36xbf16>
    %c0_39 = arith.constant 0 : index
    %c0_40 = arith.constant 0 : index
    %40 = vector.load %arg7[%c0_39, %c0_40] : memref<36x384xf32, #tpu.memory_space<vmem>>, vector<36x384xf32>
    %41 = arith.truncf %40 : vector<36x384xf32> to vector<36x384xbf16>
    %cst = arith.constant dense<0.000000e+00> : vector<8x384xf32>
    %42 = tpu.matmul %39, %41, %cst {dimension_numbers = #tpu.dot_dimension_numbers<[1], [0], [0], [1], [0, 0, 1, 1], [], []>} : vector<8x36xbf16>, vector<36x384xbf16>, vector<8x384xf32> -> vector<8x384xf32>
    %43 = arith.index_cast %1 : i32 to index
    %c0_41 = arith.constant 0 : index
    %44 = vector.load %arg5[%43, %c0_41] : memref<8x1xf32, #tpu.memory_space<vmem>>, vector<8x1xf32>
    %45 = vector.broadcast %44 : vector<8x1xf32> to vector<8x384xf32>
    %46 = arith.addf %42, %45 : vector<8x384xf32>
    %cst_42 = arith.constant 0.000000e+00 : f32
    %47 = vector.broadcast %cst_42 : f32 to vector<8x384xf32>
    %48 = arith.maximumf %46, %47 : vector<8x384xf32>
    %49 = arith.truncf %48 : vector<8x384xf32> to vector<8x384xbf16>
    %c0_43 = arith.constant 0 : index
    %c0_44 = arith.constant 0 : index
    %c0_45 = arith.constant 0 : index
    %50 = vector.load %arg6[%c0_43, %c0_44, %c0_45] : memref<1x8x384xbf16, #tpu.memory_space<vmem>>, vector<1x8x384xbf16>
    %51 = vector.shape_cast %50 : vector<1x8x384xbf16> to vector<8x384xbf16>
    %52 = vector.shape_cast %49 : vector<8x384xbf16> to vector<1x8x384xbf16>
    tpu.vector_store %arg6[%c0_43, %c0_44, %c0_45], %52 {strides = array<i32>} : memref<1x8x384xbf16, #tpu.memory_space<vmem>>, vector<1x8x384xbf16>,
    return
  }
  func.func @transform_0(%arg0: i32, %arg1: i32, %arg2: i32) -> (i32, i32, i32, i32) {
    %c0_i32 = arith.constant 0 : i32
    %c0_i32_0 = arith.constant 0 : i32
    %c0_i32_1 = arith.constant 0 : i32
    return %arg0, %arg1, %c0_i32, %c0_i32_0 : i32, i32, i32, i32
  }
  func.func @transform_1(%arg0: i32, %arg1: i32, %arg2: i32) -> (i32, i32) {
    %c0_i32 = arith.constant 0 : i32
    %c0_i32_0 = arith.constant 0 : i32
    %c0_i32_1 = arith.constant 0 : i32
    return %c0_i32, %c0_i32_0 : i32, i32
  }
  func.func @transform_2(%arg0: i32, %arg1: i32, %arg2: i32) -> (i32, i32) {
    %c0_i32 = arith.constant 0 : i32
    %c0_i32_0 = arith.constant 0 : i32
    %c0_i32_1 = arith.constant 0 : i32
    return %c0_i32, %c0_i32_0 : i32, i32
  }
  func.func @transform_3(%arg0: i32, %arg1: i32, %arg2: i32) -> (i32, i32, i32) {
    %c0_i32 = arith.constant 0 : i32
    return %arg0, %arg2, %arg1 : i32, i32, i32
  }
}

</mosaic_0001>

<llo_original>
// kernel: tpu_custom_call.1
$region0: #{tpu_custom_call.1}
  #allocation0 [shape = 'u32[]', space=smem, size = 0x4, offset = 0x4, fixed_abs, tag = 'smem constant byte address 0x4 - core index']
  #allocation1 [shape = 'u32[72,128]{1,0:T(1,128)}', space=vmem, size = 0x9000, scoped, tag = 'internal scratch']
  #allocation2 [shape = 'f32[36,384]{1,0:T(8,128)}', space=vmem, size = 0xf000, scoped, tag = 'scratch operand']
  %s0 = inlined_call_operand.hbm [shape: bf16[2,1,4,512], index: 0, kind: input, shape index: {}]
  %s1 = inlined_call_operand.vmem [shape: bf16[8,36], index: 1, kind: input, shape index: {}]
  %s2 = inlined_call_operand.vmem [shape: f32[8,1], index: 2, kind: input, shape index: {}]
  %s3 = inlined_call_operand.hbm [shape: bf16[2,8,384], index: 3, kind: output, shape index: {}]
  %s4 = sld [smem:[#allocation0]]
  $region49: #{tpu_custom_call.1} parent=0
    _
  %s6 = ssub.s32 1, %s4
  %s7 = scalar_select 0, %s6, %s4
  $region1: #{tpu_custom_call.1} parent=0
    #allocation3 [shape = 'u8[8192]{0}', space=vmem, size = 0x2000, scoped, tag = 'input window, operand 0']
    #allocation4 [shape = 's32[2]{0}', space=sflag, size = 0x8, scoped, tag = 'scoped memory for tpu_custom_call.1']
    #allocation5 [shape = 's32[2]{0}', space=sflag, size = 0x8, scoped, tag = 'scoped memory for tpu_custom_call.1']
    #allocation6 [shape = 'u8[12288]{0}', space=vmem, size = 0x3000, scoped, tag = 'output window, operand 0']
    %8 = vsyncpa [#allocation4], 0
    %s9 = scalar_lea.sflag [#allocation4], 1
    %10 = vsyncpa %s9, 0
    %11 = vsyncpa [#allocation5], 0
    %s12 = scalar_lea.sflag [#allocation5], 1
    %13 = vsyncpa %s12, 0
    loop: start=0, step=1, limit=4
    $region2: #{tpu_custom_call.1} parent=1 // loop_pre_header
      _
    $region3: #{tpu_custom_call.1} parent=1 // loop_header
      %s15 = sphi 0, %s19
      %p16 = scmp.ge.s32.totalorder %s15, 4
      %s22 = sphi 0, %s41
      %s23 = sphi 0, %s37
      %s24 = sphi 0, %s33
      %s25 = sphi 0, %s22
      %s26 = sphi 0, %s23
      %s27 = sphi 0, %s24
      %s28 = sphi 0, %s25
      %s29 = sphi 0, %s26
      %s30 = sphi 0, %s27
      %s46 = sphi 0, %s48
      %s49 = sphi 0, %s46
      %s50 = sphi 0, %s49
      %s66 = sphi 0, %s50
      %s70 = sphi 0, %s70
      %s72 = sphi 0, %s70
      %s73 = sphi 0, %s72
      %s87 = sphi 0, %s73
      %s91 = sphi 0, %s91
      %s93 = sphi 0, %s91
      %s94 = sphi 0, %s93
      %s108 = sphi 0, %s94
      %s118 = sphi 0, %s120
      %s121 = sphi 0, %s118
      %s122 = sphi 0, %s121
      %s138 = sphi 0, %s122
    $region4: #{tpu_custom_call.1} parent=1 // loop_header_branch
      %18 = sbr.rel (%p16) target = $region8
    $region5: #{tpu_custom_call.1} parent=1 // loop_body
      %s20 = ssub.s32 %s15, 1
      %s21 = ssub.s32 %s15, 2
      %s31 = sadd.s32 1, %s24
      %p32 = scmp.ge.s32.totalorder %s31, 1
      %s33 = scalar_select %p32, 0, %s31
      %s34 = sadd.s32 1, %s23
      %s35 = scalar_select %p32, %s34, %s23
      %p36 = scmp.ge.s32.totalorder %s35, 1
      %s37 = scalar_select %p36, 0, %s35
      %s38 = sadd.s32 1, %s22
      %s39 = scalar_select %p36, %s38, %s22
      %p40 = scmp.ge.s32.totalorder %s39, 2
      %s41 = scalar_select %p40, 0, %s39
      %s42 = ssub.s32 %s22, %s41
      %s43 = ssub.s32 %s23, %s37
      %s44 = sor.u32 %s42, %s43
      %p45 = scmp.eq.s32.totalorder %s44, 0
      %s47 = sadd.s32 %s46, 1
      %s48 = scalar_select %p45, %s46, %s47
      %p51 = pneg %p45
      %p52 = scmp.eq.s32.totalorder %s15, 1
      %p53 = por %p51, %p52
      %p54 = scmp.ne.s32.totalorder %s46, %s49
      %p55 = scmp.eq.s32.totalorder %s15, 0
      %p56 = por %p54, %p55
      %p57 = scmp.ne.s32.totalorder %s46, %s49
      %p58 = scmp.eq.s32.totalorder %s20, 1
      %p59 = por %p57, %p58
      %p60 = scmp.ne.s32.totalorder %s49, %s50
      %p61 = scmp.eq.s32.totalorder %s20, 0
      %p62 = por %p60, %p61
      %p63 = scmp.ne.s32.totalorder %s49, %s50
      %p64 = scmp.eq.s32.totalorder %s21, 1
      %p65 = por %p63, %p64
      %p67 = scmp.ne.s32.totalorder %s50, %s66
      %p68 = scmp.eq.s32.totalorder %s21, 0
      %p69 = por %p67, %p68
      %s71 = sadd.s32 %s70, 1
      %p74 = scmp.eq.s32.totalorder %s15, 1
      %p75 = scmp.ne.s32.totalorder %s70, %s72
      %p76 = scmp.eq.s32.totalorder %s15, 0
      %p77 = por %p75, %p76
      %p78 = scmp.ne.s32.totalorder %s70, %s72
      %p79 = scmp.eq.s32.totalorder %s20, 1
      %p80 = por %p78, %p79
      %p81 = scmp.ne.s32.totalorder %s72, %s73
      %p82 = scmp.eq.s32.totalorder %s20, 0
      %p83 = por %p81, %p82
      %p84 = scmp.ne.s32.totalorder %s72, %s73
      %p85 = scmp.eq.s32.totalorder %s21, 1
      %p86 = por %p84, %p85
      %p88 = scmp.ne.s32.totalorder %s73, %s87
      %p89 = scmp.eq.s32.totalorder %s21, 0
      %p90 = por %p88, %p89
      %s92 = sadd.s32 %s91, 1
      %p95 = scmp.eq.s32.totalorder %s15, 1
      %p96 = scmp.ne.s32.totalorder %s91, %s93
      %p97 = scmp.eq.s32.totalorder %s15, 0
      %p98 = por %p96, %p97
      %p99 = scmp.ne.s32.totalorder %s91, %s93
      %p100 = scmp.eq.s32.totalorder %s20, 1
      %p101 = por %p99, %p100
      %p102 = scmp.ne.s32.totalorder %s93, %s94
      %p103 = scmp.eq.s32.totalorder %s20, 0
      %p104 = por %p102, %p103
      %p105 = scmp.ne.s32.totalorder %s93, %s94
      %p106 = scmp.eq.s32.totalorder %s21, 1
      %p107 = por %p105, %p106
      %p109 = scmp.ne.s32.totalorder %s94, %s108
      %p110 = scmp.eq.s32.totalorder %s21, 0
      %p111 = por %p109, %p110
      %s112 = ssub.s32 %s22, %s41
      %s113 = ssub.s32 %s24, %s33
      %s114 = sor.u32 %s112, %s113
      %s115 = ssub.s32 %s23, %s37
      %s116 = sor.u32 %s114, %s115
      %p117 = scmp.eq.s32.totalorder %s116, 0
      %s119 = sadd.s32 %s118, 1
      %s120 = scalar_select %p117, %s118, %s119
      %p123 = pneg %p117
      %p124 = scmp.eq.s32.totalorder %s15, 1
      %p125 = por %p123, %p124
      %p126 = scmp.ne.s32.totalorder %s118, %s121
      %p127 = scmp.eq.s32.totalorder %s15, 0
      %p128 = por %p126, %p127
      %p129 = scmp.ne.s32.totalorder %s118, %s121
      %p130 = scmp.eq.s32.totalorder %s20, 1
      %p131 = por %p129, %p130
      %p132 = scmp.ne.s32.totalorder %s121, %s122
      %p133 = scmp.eq.s32.totalorder %s20, 0
      %p134 = por %p132, %p133
      %p135 = scmp.ne.s32.totalorder %s121, %s122
      %p136 = scmp.eq.s32.totalorder %s21, 1
      %p137 = por %p135, %p136
      %p139 = scmp.ne.s32.totalorder %s122, %s138
      %p140 = scmp.eq.s32.totalorder %s21, 0
      %p141 = por %p139, %p140
      %p142 = scmp.le.s32.totalorder 1, %s15
      %p143 = scmp.lt.s32.totalorder %s15, 3
      %p144 = pnand %p142, %p143
      %p145 = pneg %p144
      // Predicated region
      $region9: #{tpu_custom_call.1} parent=5 // pred_check
        _
      $region10: #{tpu_custom_call.1} parent=5 // pred_check_branch
        %147 = sbr.rel (%p144) target = $region12
      $region11: #{tpu_custom_call.1} parent=5 // pred_region
        %s148 = ssub.s32 %s15, 1
        // Predicated region
        $region13: #{tpu_custom_call.1} parent=11 // pred_check
          %p149 = pneg %p83
        $region14: #{tpu_custom_call.1} parent=11 // pred_check_branch
          %151 = sbr.rel (%p149) target = $region16
        $region15: #{tpu_custom_call.1} parent=11 // pred_region
          _
        $region16: #{tpu_custom_call.1} parent=11 // pred_fallthru
          _
        // Predicated region
        $region17: #{tpu_custom_call.1} parent=11 // pred_check
          %p152 = pneg %p104
        $region18: #{tpu_custom_call.1} parent=11 // pred_check_branch
          %154 = sbr.rel (%p152) target = $region20
        $region19: #{tpu_custom_call.1} parent=11 // pred_region
          _
        $region20: #{tpu_custom_call.1} parent=11 // pred_fallthru
          _
      $region12: #{tpu_custom_call.1} parent=5 // pred_fallthru
        _
      %p155 = scmp.lt.s32.totalorder %s15, 2
      // Predicated region
      $region21: #{tpu_custom_call.1} parent=5 // pred_check
        %p156 = pneg %p155
      $region22: #{tpu_custom_call.1} parent=5 // pred_check_branch
        %158 = sbr.rel (%p156) target = $region24
      $region23: #{tpu_custom_call.1} parent=5 // pred_region
        // Predicated region
        $region25: #{tpu_custom_call.1} parent=23 // pred_check
          %p159 = pneg %p56
        $region26: #{tpu_custom_call.1} parent=23 // pred_check_branch
          %161 = sbr.rel (%p159) target = $region28
        $region27: #{tpu_custom_call.1} parent=23 // pred_region
          %s162 = sand.u32 %s46, 1
          %s163 = scalar_lea.sflag [#allocation4], %s162
          %s164 = sand.u32 %s46, 1
          %s165 = smul.addr %s164, 8
          %s166 = scalar_lea.vmem [#allocation3], %s165
          %168 = vsyncadd %s163, 0
          %s169 = smul.addr %s23, 4
          %s170 = smul.addr %s22, 4
          %s171 = sadd.s32 %s169, %s170
          %s172 = smul.addr %s171, 2
          %s173 = scalar_lea.hbm %s0, %s172
          %s175 = sshll.u32 %s173, 4
          %s176 = int_to_ptr.hbm [resolvable:$true] %s175
          %s177 = sshll.u32 %s166, 4
          %s178 = int_to_ptr.vmem [resolvable:$true] %s177
          %180 = dma.hbm_to_vmem [thread:$0]  %s176, 128, %s178, %s163
        $region28: #{tpu_custom_call.1} parent=23 // pred_fallthru
          _
      $region24: #{tpu_custom_call.1} parent=5 // pred_fallthru
        _
      %p181 = scmp.le.s32.totalorder 1, %s15
      %p182 = scmp.lt.s32.totalorder %s15, 3
      %p183 = pnand %p181, %p182
      %p184 = pneg %p183
      // Predicated region
      $region29: #{tpu_custom_call.1} parent=5 // pred_check
        _
      $region30: #{tpu_custom_call.1} parent=5 // pred_check_branch
        %186 = sbr.rel (%p183) target = $region32
      $region31: #{tpu_custom_call.1} parent=5 // pred_region
        %s187 = ssub.s32 %s15, 1
        %s188 = sand.u32 %s49, 1
        %s189 = scalar_lea.sflag [#allocation4], %s188
        %s190 = sand.u32 %s49, 1
        %s191 = smul.addr %s190, 8
        %s192 = scalar_lea.vmem [#allocation3], %s191
        // Predicated region
        $region33: #{tpu_custom_call.1} parent=31 // pred_check
          %p193 = pneg %p62
        $region34: #{tpu_custom_call.1} parent=31 // pred_check_branch
          %195 = sbr.rel (%p193) target = $region36
        $region35: #{tpu_custom_call.1} parent=31 // pred_region
          %197 = dma.done %s189, 128
        $region36: #{tpu_custom_call.1} parent=31 // pred_fallthru
          _
        %s198 = sand.u32 %s49, 1
        %s199 = scalar_lea.sflag [#allocation4], %s198
        %s200 = sand.u32 %s49, 1
        %s201 = smul.addr %s200, 8
        %s202 = scalar_lea.vmem [#allocation3], %s201
        %p203 = pneg %p62
        %p204 = pneg %p59
        %p205 = pneg %p83
        %p206 = pneg %p80
        %p207 = pneg %p104
        %p208 = pneg %p101
        %p209 = pneg %p134
        %p210 = pneg %p131
        %s211 = sand.u32 %s121, 1
        %s212 = scalar_lea.sflag [#allocation5], %s211
        %s213 = sand.u32 %s121, 1
        %s214 = smul.addr %s213, 12
        %s215 = scalar_lea.vmem [#allocation6], %s214
        %s216 = smul.u32 3, %s26
        %s218 = smul.u32 %s27, 8
        %v219 = vld [vmem:[%s192] sm:$0x3f]
        %v220 = vunpack.c.l.bf16 %v219
        %v221 = vunpack.c.h.bf16 %v219
        %224 = vst [vmem:[#allocation1] ss:$2 sm:$0xff] %v220
        %s225 = scalar_lea.vmem [#allocation1], 16
        %226 = vst [vmem:[%s225] ss:$2 sm:$0xff] %v221
        %v227 = vld.sshfl [vmem:[#allocation1] sm:$0xff pattern:$0x75316420]
        %v228 = vld.sshfl [vmem:[#allocation1 + $0x8] sm:$0xff pattern:$0x75316420]
        %v229 = vld.sshfl [vmem:[#allocation1 + $0x10] sm:$0xff pattern:$0x75316420]
        %233 = vst [vmem:[#allocation2] sm:$0xf] %v227
        %234 = vst [vmem:[#allocation2 + $0x8] sm:$0xf] %v228
        %235 = vst [vmem:[#allocation2 + $0x10] sm:$0xf] %v229
        %v236 = vld [vmem:[%s192] sm:$0xff]
        %v237 = vunpack.c.l.bf16 %v236
        %v238 = vunpack.c.h.bf16 %v236
        %s241 = scalar_lea.vmem [#allocation1], 1
        %242 = vst [vmem:[%s241] ss:$2 sm:$0xff] %v237
        %s243 = scalar_lea.vmem [#allocation1], 17
        %244 = vst [vmem:[%s243] ss:$2 sm:$0xff] %v238
        %v245 = vld.sshfl [vmem:[#allocation1] sm:$0xff pattern:$0x75316420]
        %v246 = vld.sshfl [vmem:[#allocation1 + $0x8] sm:$0xff pattern:$0x75316420]
        %v247 = vld.sshfl [vmem:[#allocation1 + $0x10] sm:$0xff pattern:$0x75316420]
        %v248 = vld.sshfl [vmem:[#allocation1 + $0x18] sm:$0xff pattern:$0x75316420]
        %249 = vrot.lane.b32.xlu0 %v245, 127
        %v250 = vpop.permute.xlu0 %249
        %251 = vrot.lane.b32.xlu0 %v246, 127
        %v252 = vpop.permute.xlu0 %251
        %253 = vrot.lane.b32.xlu0 %v247, 127
        %v254 = vpop.permute.xlu0 %253
        %255 = vrot.lane.b32.xlu0 %v248, 127
        %v256 = vpop.permute.xlu0 %255
        %vm257 = vcmask 1039360
        %v258 = vsel %vm257, %v250, %v252
        %v259 = vsel %vm257, %v252, %v254
        %v260 = vsel %vm257, %v254, %v256
        %264 = vst [vmem:[#allocation2] sm:$0xf0] %v258
        %265 = vst [vmem:[#allocation2 + $0x8] sm:$0xf0] %v259
        %266 = vst [vmem:[#allocation2 + $0x10] sm:$0xf0] %v260
        %v267 = vld [vmem:[%s192] sm:$0xff]
        %v268 = vunpack.c.l.bf16 %v267
        %v269 = vunpack.c.h.bf16 %v267
        %272 = vst [vmem:[#allocation1] ss:$2 sm:$0xff] %v268
        %s273 = scalar_lea.vmem [#allocation1], 16
        %274 = vst [vmem:[%s273] ss:$2 sm:$0xff] %v269
        %v275 = vld.sshfl [vmem:[#allocation1] sm:$0xff pattern:$0x75316420]
        %v276 = vld.sshfl [vmem:[#allocation1 + $0x8] sm:$0xff pattern:$0x75316420]
        %v277 = vld.sshfl [vmem:[#allocation1 + $0x10] sm:$0xff pattern:$0x75316420]
        %v278 = vld.sshfl [vmem:[#allocation1 + $0x18] sm:$0xff pattern:$0x75316420]
        %279 = vrot.lane.b32.xlu0 %v275, 126
        %v280 = vpop.permute.xlu0 %279
        %281 = vrot.lane.b32.xlu0 %v276, 126
        %v282 = vpop.permute.xlu0 %281
        %283 = vrot.lane.b32.xlu0 %v277, 126
        %v284 = vpop.permute.xlu0 %283
        %285 = vrot.lane.b32.xlu0 %v278, 126
        %v286 = vpop.permute.xlu0 %285
        %vm287 = vcmask 1031168
        %v288 = vsel %vm287, %v280, %v282
        %v289 = vsel %vm287, %v282, %v284
        %v290 = vsel %vm287, %v284, %v286
        %294 = vst [vmem:[#allocation2 + $0x18] sm:$0xf] %v288
        %295 = vst [vmem:[#allocation2 + $0x20] sm:$0xf] %v289
        %296 = vst [vmem:[#allocation2 + $0x28] sm:$0xf] %v290
        %v297 = vld [vmem:[%s192] sm:$0xff]
        %v298 = vunpack.c.l.bf16 %v297
        %v299 = vunpack.c.h.bf16 %v297
        %s302 = scalar_lea.vmem [#allocation1], 1
        %303 = vst [vmem:[%s302] ss:$2 sm:$0xff] %v298
        %s304 = scalar_lea.vmem [#allocation1], 17
        %305 = vst [vmem:[%s304] ss:$2 sm:$0xff] %v299
        %v306 = vld.sshfl [vmem:[#allocation1] sm:$0xff pattern:$0x75316420]
        %v307 = vld.sshfl [vmem:[#allocation1 + $0x8] sm:$0xff pattern:$0x75316420]
        %v308 = vld.sshfl [vmem:[#allocation1 + $0x10] sm:$0xff pattern:$0x75316420]
        %v309 = vld.sshfl [vmem:[#allocation1 + $0x18] sm:$0xff pattern:$0x75316420]
        %310 = vrot.lane.b32.xlu0 %v306, 110
        %v311 = vpop.permute.xlu0 %310
        %312 = vrot.lane.b32.xlu0 %v307, 110
        %v313 = vpop.permute.xlu0 %312
        %314 = vrot.lane.b32.xlu0 %v308, 110
        %v315 = vpop.permute.xlu0 %314
        %316 = vrot.lane.b32.xlu0 %v309, 110
        %v317 = vpop.permute.xlu0 %316
        %vm318 = vcmask 900096
        %v319 = vsel %vm318, %v311, %v313
        %v320 = vsel %vm318, %v313, %v315
        %v321 = vsel %vm318, %v315, %v317
        %325 = vst [vmem:[#allocation2 + $0x18] sm:$0xf0] %v319
        %326 = vst [vmem:[#allocation2 + $0x20] sm:$0xf0] %v320
        %327 = vst [vmem:[#allocation2 + $0x28] sm:$0xf0] %v321
        %v328 = vld [vmem:[%s192] sm:$0xff]
        %v329 = vunpack.c.l.bf16 %v328
        %v330 = vunpack.c.h.bf16 %v328
        %333 = vst [vmem:[#allocation1] ss:$2 sm:$0xff] %v329
        %s334 = scalar_lea.vmem [#allocation1], 16
        %335 = vst [vmem:[%s334] ss:$2 sm:$0xff] %v330
        %v336 = vld.sshfl [vmem:[#allocation1] sm:$0xff pattern:$0x75316420]
        %v337 = vld.sshfl [vmem:[#allocation1 + $0x8] sm:$0xff pattern:$0x75316420]
        %v338 = vld.sshfl [vmem:[#allocation1 + $0x10] sm:$0xff pattern:$0x75316420]
        %v339 = vld.sshfl [vmem:[#allocation1 + $0x18] sm:$0xff pattern:$0x75316420]
        %340 = vrot.lane.b32.xlu0 %v336, 109
        %v341 = vpop.permute.xlu0 %340
        %342 = vrot.lane.b32.xlu0 %v337, 109
        %v343 = vpop.permute.xlu0 %342
        %344 = vrot.lane.b32.xlu0 %v338, 109
        %v345 = vpop.permute.xlu0 %344
        %346 = vrot.lane.b32.xlu0 %v339, 109
        %v347 = vpop.permute.xlu0 %346
        %vm348 = vcmask 891904
        %v349 = vsel %vm348, %v341, %v343
        %v350 = vsel %vm348, %v343, %v345
        %v351 = vsel %vm348, %v345, %v347
        %355 = vst [vmem:[#allocation2 + $0x30] sm:$0xf] %v349
        %356 = vst [vmem:[#allocation2 + $0x38] sm:$0xf] %v350
        %357 = vst [vmem:[#allocation2 + $0x40] sm:$0xf] %v351
        %v358 = vld [vmem:[%s192] sm:$0xff]
        %v359 = vunpack.c.l.bf16 %v358
        %v360 = vunpack.c.h.bf16 %v358
        %s363 = scalar_lea.vmem [#allocation1], 1
        %364 = vst [vmem:[%s363] ss:$2 sm:$0xff] %v359
        %s365 = scalar_lea.vmem [#allocation1], 17
        %366 = vst [vmem:[%s365] ss:$2 sm:$0xff] %v360
        %v367 = vld.sshfl [vmem:[#allocation1] sm:$0xff pattern:$0x75316420]
        %v368 = vld.sshfl [vmem:[#allocation1 + $0x8] sm:$0xff pattern:$0x75316420]
        %v369 = vld.sshfl [vmem:[#allocation1 + $0x10] sm:$0xff pattern:$0x75316420]
        %v370 = vld.sshfl [vmem:[#allocation1 + $0x18] sm:$0xff pattern:$0x75316420]
        %371 = vrot.lane.b32.xlu0 %v367, 108
        %v372 = vpop.permute.xlu0 %371
        %373 = vrot.lane.b32.xlu0 %v368, 108
        %v374 = vpop.permute.xlu0 %373
        %375 = vrot.lane.b32.xlu0 %v369, 108
        %v376 = vpop.permute.xlu0 %375
        %377 = vrot.lane.b32.xlu0 %v370, 108
        %v378 = vpop.permute.xlu0 %377
        %vm379 = vcmask 883712
        %v380 = vsel %vm379, %v372, %v374
        %v381 = vsel %vm379, %v374, %v376
        %v382 = vsel %vm379, %v376, %v378
        %386 = vst [vmem:[#allocation2 + $0x30] sm:$0xf0] %v380
        %387 = vst [vmem:[#allocation2 + $0x38] sm:$0xf0] %v381
        %388 = vst [vmem:[#allocation2 + $0x40] sm:$0xf0] %v382
        %v389 = vld [vmem:[%s192] sm:$0xff]
        %v390 = vunpack.c.l.bf16 %v389
        %v391 = vunpack.c.h.bf16 %v389
        %394 = vst [vmem:[#allocation1] ss:$2 sm:$0xff] %v390
        %s395 = scalar_lea.vmem [#allocation1], 16
        %396 = vst [vmem:[%s395] ss:$2 sm:$0xff] %v391
        %v397 = vld.sshfl [vmem:[#allocation1] sm:$0xff pattern:$0x75316420]
        %v398 = vld.sshfl [vmem:[#allocation1 + $0x8] sm:$0xff pattern:$0x75316420]
        %v399 = vld.sshfl [vmem:[#allocation1 + $0x10] sm:$0xff pattern:$0x75316420]
        %v400 = vld.sshfl [vmem:[#allocation1 + $0x18] sm:$0xff pattern:$0x75316420]
        %401 = vrot.lane.b32.xlu0 %v397, 92
        %v402 = vpop.permute.xlu0 %401
        %403 = vrot.lane.b32.xlu0 %v398, 92
        %v404 = vpop.permute.xlu0 %403
        %405 = vrot.lane.b32.xlu0 %v399, 92
        %v406 = vpop.permute.xlu0 %405
        %407 = vrot.lane.b32.xlu0 %v400, 92
        %v408 = vpop.permute.xlu0 %407
        %vm409 = vcmask 752640
        %v410 = vsel %vm409, %v402, %v404
        %v411 = vsel %vm409, %v404, %v406
        %v412 = vsel %vm409, %v406, %v408
        %416 = vst [vmem:[#allocation2 + $0x48] sm:$0xf] %v410
        %417 = vst [vmem:[#allocation2 + $0x50] sm:$0xf] %v411
        %418 = vst [vmem:[#allocation2 + $0x58] sm:$0xf] %v412
        %v419 = vld [vmem:[%s192] sm:$0xff]
        %v420 = vunpack.c.l.bf16 %v419
        %v421 = vunpack.c.h.bf16 %v419
        %s424 = scalar_lea.vmem [#allocation1], 1
        %425 = vst [vmem:[%s424] ss:$2 sm:$0xff] %v420
        %s426 = scalar_lea.vmem [#allocation1], 17
        %427 = vst [vmem:[%s426] ss:$2 sm:$0xff] %v421
        %v428 = vld.sshfl [vmem:[#allocation1] sm:$0xff pattern:$0x75316420]
        %v429 = vld.sshfl [vmem:[#allocation1 + $0x8] sm:$0xff pattern:$0x75316420]
        %v430 = vld.sshfl [vmem:[#allocation1 + $0x10] sm:$0xff pattern:$0x75316420]
        %v431 = vld.sshfl [vmem:[#allocation1 + $0x18] sm:$0xff pattern:$0x75316420]
        %432 = vrot.lane.b32.xlu0 %v428, 91
        %v433 = vpop.permute.xlu0 %432
        %434 = vrot.lane.b32.xlu0 %v429, 91
        %v435 = vpop.permute.xlu0 %434
        %436 = vrot.lane.b32.xlu0 %v430, 91
        %v437 = vpop.permute.xlu0 %436
        %438 = vrot.lane.b32.xlu0 %v431, 91
        %v439 = vpop.permute.xlu0 %438
        %vm440 = vcmask 744448
        %v441 = vsel %vm440, %v433, %v435
        %v442 = vsel %vm440, %v435, %v437
        %v443 = vsel %vm440, %v437, %v439
        %447 = vst [vmem:[#allocation2 + $0x48] sm:$0xf0] %v441
        %448 = vst [vmem:[#allocation2 + $0x50] sm:$0xf0] %v442
        %449 = vst [vmem:[#allocation2 + $0x58] sm:$0xf0] %v443
        %v450 = vld [vmem:[%s192] sm:$0xff]
        %v451 = vunpack.c.l.bf16 %v450
        %v452 = vunpack.c.h.bf16 %v450
        %455 = vst [vmem:[#allocation1] ss:$2 sm:$0xff] %v451
        %s456 = scalar_lea.vmem [#allocation1], 16
        %457 = vst [vmem:[%s456] ss:$2 sm:$0xff] %v452
        %v458 = vld.sshfl [vmem:[#allocation1] sm:$0xff pattern:$0x75316420]
        %v459 = vld.sshfl [vmem:[#allocation1 + $0x8] sm:$0xff pattern:$0x75316420]
        %v460 = vld.sshfl [vmem:[#allocation1 + $0x10] sm:$0xff pattern:$0x75316420]
        %v461 = vld.sshfl [vmem:[#allocation1 + $0x18] sm:$0xff pattern:$0x75316420]
        %462 = vrot.lane.b32.xlu0 %v458, 90
        %v463 = vpop.permute.xlu0 %462
        %464 = vrot.lane.b32.xlu0 %v459, 90
        %v465 = vpop.permute.xlu0 %464
        %466 = vrot.lane.b32.xlu0 %v460, 90
        %v467 = vpop.permute.xlu0 %466
        %468 = vrot.lane.b32.xlu0 %v461, 90
        %v469 = vpop.permute.xlu0 %468
        %vm470 = vcmask 736256
        %v471 = vsel %vm470, %v463, %v465
        %v472 = vsel %vm470, %v465, %v467
        %v473 = vsel %vm470, %v467, %v469
        %477 = vst [vmem:[#allocation2 + $0x60] sm:$0xf] %v471
        %478 = vst [vmem:[#allocation2 + $0x68] sm:$0xf] %v472
        %479 = vst [vmem:[#allocation2 + $0x70] sm:$0xf] %v473
        %s480 = sshra.s32 %s218, 3
        %s481 = sand.u32 %s218, 7
        %s482 = smul.addr %s480, 4
        %s483 = scalar_lea.vmem %s1, %s482
        %v484 = vld [vmem:[%s483] sm:$0xf]
        %v485 = vld [vmem:[#allocation2] sm:$0xff]
        %v486 = vld [vmem:[#allocation2 + $0x8] sm:$0xff]
        %v487 = vld [vmem:[#allocation2 + $0x10] sm:$0xff]
        %v488 = vld [vmem:[#allocation2 + $0x18] sm:$0xff]
        %v489 = vld [vmem:[#allocation2 + $0x20] sm:$0xff]
        %v490 = vld [vmem:[#allocation2 + $0x28] sm:$0xff]
        %v491 = vld [vmem:[#allocation2 + $0x30] sm:$0xff]
        %v492 = vld [vmem:[#allocation2 + $0x38] sm:$0xff]
        %v493 = vld [vmem:[#allocation2 + $0x40] sm:$0xff]
        %v494 = vld [vmem:[#allocation2 + $0x48] sm:$0xff]
        %v495 = vld [vmem:[#allocation2 + $0x50] sm:$0xff]
        %v496 = vld [vmem:[#allocation2 + $0x58] sm:$0xff]
        %v497 = vld [vmem:[#allocation2 + $0x60] sm:$0xf]
        %v498 = vld [vmem:[#allocation2 + $0x68] sm:$0xf]
        %v499 = vld [vmem:[#allocation2 + $0x70] sm:$0xf]
        %v500 = vpack.c.bf16 %v488, %v485
        %v501 = vpack.c.bf16 %v489, %v486
        %v502 = vpack.c.bf16 %v490, %v487
        %v503 = vpack.c.bf16 %v494, %v491
        %v504 = vpack.c.bf16 %v495, %v492
        %v505 = vpack.c.bf16 %v496, %v493
        %v506 = vpack.c.bf16 %v497, %v497
        %v507 = vpack.c.bf16 %v498, %v498
        %v508 = vpack.c.bf16 %v499, %v499
        %s509 = scalar_lea.vmem %s2, %s218
        %v510 = vld [vmem:[%s509] sm:$0xff]
        %512 = vset.pattern.permute.xlu0 0
        %513 = vperm.xlu0 %512, %v510
        %v514 = vpop.permute.xlu0 %513
        %vm516 = vcmask 293888
        %v518 = vsel %vm516, %v484, 0
        %vm520 = vcmask 1041408
        %v522 = vsel %vm520, %v506, 0
        %v525 = vsel %vm520, %v507, 0
        %v528 = vsel %vm520, %v508, 0
        %530 = vmatpush.bf16.msra.mxu0 0
        %531 = vmatpush.bf16.msra.mxu0 0
        %532 = vmatpush.bf16.msra.mxu0 0
        %533 = vmatpush.bf16.msra.mxu0 0
        %534 = vmatpush.bf16.msra.mxu0 0
        %535 = vmatpush.bf16.msra.mxu0 %v522
        %536 = vmatpush.bf16.msra.mxu0 %v503
        %537 = vmatpush.bf16.msra.mxu0 %v500
        %538 = vmatmul.bf16.gmra.mxu0 %v518
        %v539 = vpop.f32.mrf.mxu0
        %v540 = vadd.f32 %v514, %v539
        %v541 = vpop.f32.mrf.mxu0
        %542 = vdwg.mxu0
        %543 = vmatpush.bf16.msra.mxu0 0
        %544 = vmatpush.bf16.msra.mxu0 0
        %545 = vmatpush.bf16.msra.mxu0 0
        %546 = vmatpush.bf16.msra.mxu0 0
        %547 = vmatpush.bf16.msra.mxu0 0
        %548 = vmatpush.bf16.msra.mxu0 %v525
        %549 = vmatpush.bf16.msra.mxu0 %v504
        %550 = vmatpush.bf16.msra.mxu0 %v501
        %551 = vmatmul.bf16.gmra.mxu0 %v518
        %v552 = vpop.f32.mrf.mxu0
        %v553 = vadd.f32 %v514, %v552
        %v554 = vpop.f32.mrf.mxu0
        %555 = vdwg.mxu0
        %556 = vmatpush.bf16.msra.mxu0 0
        %557 = vmatpush.bf16.msra.mxu0 0
        %558 = vmatpush.bf16.msra.mxu0 0
        %559 = vmatpush.bf16.msra.mxu0 0
        %560 = vmatpush.bf16.msra.mxu0 0
        %561 = vmatpush.bf16.msra.mxu0 %v528
        %562 = vmatpush.bf16.msra.mxu0 %v505
        %563 = vmatpush.bf16.msra.mxu0 %v502
        %564 = vmatmul.bf16.gmra.mxu0 %v518
        %v565 = vpop.f32.mrf.mxu0
        %v566 = vadd.f32 %v514, %v565
        %v567 = vpop.f32.mrf.mxu0
        %568 = vdwg.mxu0
        %v569 = vmax.f32 %v540, 0.0
        %v570 = vmax.f32 %v553, 0.0
        %v571 = vmax.f32 %v566, 0.0
        %v572 = vpack.c.bf16 %v570, %v569
        %v573 = vpack.c.bf16 %v571, %v571
        %574 = vst [vmem:[%s215] sm:$0xff] %v572
        %575 = vst [vmem:[%s215 + $0x8] sm:$0xf] %v573
        %s576 = sand.u32 %s121, 1
        %s577 = scalar_lea.sflag [#allocation5], %s576
        %s578 = sand.u32 %s121, 1
        %s579 = smul.addr %s578, 12
        %s580 = scalar_lea.vmem [#allocation6], %s579
        // Predicated region
        $region37: #{tpu_custom_call.1} parent=31 // pred_check
          %p581 = pneg %p131
        $region38: #{tpu_custom_call.1} parent=31 // pred_check_branch
          %583 = sbr.rel (%p581) target = $region40
        $region39: #{tpu_custom_call.1} parent=31 // pred_region
          %s584 = smul.u32 3, %s26
          %586 = vsyncadd %s577, 0
          %s587 = smul.addr %s27, 3
          %s588 = sadd.s32 %s584, %s587
          %s589 = smul.addr %s25, 3
          %s590 = sadd.s32 %s588, %s589
          %s591 = smul.addr %s590, 4
          %s592 = scalar_lea.hbm %s3, %s591
          %s594 = sshll.u32 %s580, 4
          %s595 = int_to_ptr.vmem [resolvable:$true] %s594
          %s596 = sshll.u32 %s592, 4
          %s597 = int_to_ptr.hbm [resolvable:$true] %s596
          %599 = dma.vmem_to_hbm [thread:$0]  %s595, 192, %s597, %s577
        $region40: #{tpu_custom_call.1} parent=31 // pred_fallthru
          _
      $region32: #{tpu_custom_call.1} parent=5 // pred_fallthru
        _
      %p600 = scmp.le.s32.totalorder 2, %s15
      // Predicated region
      $region41: #{tpu_custom_call.1} parent=5 // pred_check
        %p601 = pneg %p600
      $region42: #{tpu_custom_call.1} parent=5 // pred_check_branch
        %603 = sbr.rel (%p601) target = $region44
      $region43: #{tpu_custom_call.1} parent=5 // pred_region
        %s604 = ssub.s32 %s15, 2
        // Predicated region
        $region45: #{tpu_custom_call.1} parent=43 // pred_check
          %p605 = pneg %p137
        $region46: #{tpu_custom_call.1} parent=43 // pred_check_branch
          %607 = sbr.rel (%p605) target = $region48
        $region47: #{tpu_custom_call.1} parent=43 // pred_region
          %s608 = sand.u32 %s122, 1
          %s609 = scalar_lea.sflag [#allocation5], %s608
          %s610 = sand.u32 %s122, 1
          %s611 = smul.addr %s610, 12
          %s612 = scalar_lea.vmem [#allocation6], %s611
          %614 = dma.done %s609, 192
        $region48: #{tpu_custom_call.1} parent=43 // pred_fallthru
          _
      $region44: #{tpu_custom_call.1} parent=5 // pred_fallthru
        _
    $region6: #{tpu_custom_call.1} parent=1 // loop_footer
      %s19 = sadd.s32 1, %s15
    $region7: #{tpu_custom_call.1} parent=1 // loop_footer_branch
      %14 = sbr.rel target = $region3
    $region8: #{tpu_custom_call.1} parent=1 // loop_exit
      _
    %615 = vsyncpa [#allocation4], 1
    %s616 = scalar_lea.sflag [#allocation4], 1
    %617 = vsyncpa %s616, 1
    %618 = vsyncpa [#allocation5], 1
    %s619 = scalar_lea.sflag [#allocation5], 1
    %620 = vsyncpa %s619, 1

</llo_original>
